<compile_context>
chip_gen: v7x
topology: tpu7x:2x2x1
jax: 0.10.0
libtpu: 0.0.40
codegen_flags: <defaults>
</compile_context>

<pallas_src>
import functools

import jax
import jax.numpy as jnp
from jax import lax
from jax.experimental import pallas as pl
from jax.experimental.pallas import tpu as pltpu

_EPS = 1e-12                      # torch.nn.functional.normalize default
_EPS2 = _EPS * _EPS

_LANE = 128
_MAX_TILE = 512                   # cap on an N / M tile edge (pre VMEM shrink)
_VMEM_BUDGET = 24 * 1024 * 1024   # per-step working-set target (fits all gens)
_VMEM_LIMIT = 32 * 1024 * 1024    # raise v5e's 16 MiB default scoped limit


def _ceil_to(x, mult):
    return ((x + mult - 1) // mult) * mult


def _cdiv(a, b):
    return -(-a // b)


def _sublane(dtype):
    # Packed sublane tile: 8 for 32-bit, 16 for bf16/f16, 32 for 8-bit.
    return 8 * max(1, 4 // jnp.dtype(dtype).itemsize)


# ---------------------------------------------------------------------------
# Kernels
# ---------------------------------------------------------------------------

def _cosine_tiled_kernel(x_ref, y_ref, o_ref, inv_ref, *, x_is_outer):
    """One (pair, outer-tile, inner-tile) block of normalize(X) @ normalize(Y).T.

    The outer (resident) operand's inverse row norms are cached in `inv_ref`
    (computed only on the first inner step); the inner (streamed) operand is
    scaled by its inverse norms *before* the MXU dot, so the per-step epilogue
    is a single broadcasted multiply + cast.
    """
    x = x_ref[0]                                   # (tn, d), input dtype
    y = y_ref[0]                                   # (tm, d)
    d = x.shape[-1]
    first_inner = pl.program_id(2) == 0

    if x_is_outer:
        @pl.when(first_inner)
        def _():
            xf = x.astype(jnp.float32)
            inv_ref[...] = lax.rsqrt(
                jnp.maximum(jnp.sum(xf * xf, axis=-1, keepdims=True), _EPS2))
        yf = y.astype(jnp.float32)
        inv_y = lax.rsqrt(
            jnp.maximum(jnp.sum(yf * yf, axis=-1, keepdims=True), _EPS2))
        y_n = (yf * inv_y).astype(y.dtype)         # keep the MXU input dtype
        s = lax.dot_general(x, y_n, (((1,), (1,)), ((), ())),
                            preferred_element_type=jnp.float32)  # (tn, tm)
        o_ref[0] = (s * inv_ref[...]).astype(o_ref.dtype)        # * (tn, 1)
    else:
        @pl.when(first_inner)
        def _():
            yf = y.astype(jnp.float32)
            # (1, tm) lane-layout column norms via a ones-matmul (avoids a
            # (tm,1)->(1,tm) relayout); amortized over the whole inner sweep.
            ssq = lax.dot_general(jnp.ones((1, d), jnp.float32), yf * yf,
                                  (((1,), (1,)), ((), ())),
                                  preferred_element_type=jnp.float32)
            inv_ref[...] = lax.rsqrt(jnp.maximum(ssq, _EPS2))
        xf = x.astype(jnp.float32)
        inv_x = lax.rsqrt(
            jnp.maximum(jnp.sum(xf * xf, axis=-1, keepdims=True), _EPS2))
        x_n = (xf * inv_x).astype(x.dtype)
        s = lax.dot_general(x_n, y, (((1,), (1,)), ((), ())),
                            preferred_element_type=jnp.float32)  # (tn, tm)
        o_ref[0] = (s * inv_ref[...]).astype(o_ref.dtype)        # * (1, tm)


def _cosine_pairs_kernel(x_ref, y_ref, o_ref):
    """A block of whole (X, Y) pairs: out[p] = normalize(X[p]) @ normalize(Y[p]).T."""
    x = x_ref[...]                                 # (pb, n, d)
    y = y_ref[...]                                 # (pb, m, d)
    xf = x.astype(jnp.float32)
    yf = y.astype(jnp.float32)
    inv_x = lax.rsqrt(
        jnp.maximum(jnp.sum(xf * xf, axis=-1, keepdims=True), _EPS2))
    inv_y = lax.rsqrt(
        jnp.maximum(jnp.sum(yf * yf, axis=-1, keepdims=True), _EPS2))
    y_n = (yf * inv_y).astype(y.dtype)
    s = jnp.einsum('pnd,pmd->pnm', x, y_n,
                   preferred_element_type=jnp.float32)
    o_ref[...] = (s * inv_x).astype(o_ref.dtype)


# ---------------------------------------------------------------------------
# Planning (tiles, grid, which operand is resident)
# ---------------------------------------------------------------------------

def _pick_tile(size, align, cap):
    """Tile for one axis: full extent if it fits, else an `align` multiple."""
    if size <= cap:
        return size                                # full dim — always legal
    return _ceil_to(_cdiv(size, _cdiv(size, cap)), align)


def _shrink_tile(align, tile):
    return _ceil_to(max(align, tile // 2), align)


def _fit_tiles(n, m, d, in_item, out_item, align_n):
    tn = _pick_tile(n, align_n, _MAX_TILE)
    tm = _pick_tile(m, _LANE, _MAX_TILE)

    def vmem(tn, tm):
        # double-buffered input blocks + double-buffered output block + scratch
        return (2 * (tn + tm) * d * in_item
                + 2 * tn * tm * out_item
                + 4 * max(tn, tm))

    # TODO(synk): for extremely large d (>~20k) add a K-tiling "arbitrary"
    # grid axis with an f32 accumulator instead of shrinking tn/tm to floor.
    while vmem(tn, tm) > _VMEM_BUDGET and (tn > align_n or tm > _LANE):
        if tn >= tm and tn > align_n:
            tn = _shrink_tile(align_n, tn)
        elif tm > _LANE:
            tm = _shrink_tile(_LANE, tm)
        else:
            tn = _shrink_tile(align_n, tn)
    return tn, tm


def _plan(p, n, m, d, dtype, out_dtype):
    in_item = jnp.dtype(dtype).itemsize
    out_item = jnp.dtype(out_dtype).itemsize
    align_n = max(_sublane(dtype), _sublane(out_dtype))
    tn, tm = _fit_tiles(n, m, d, in_item, out_item, align_n)

    # Pair-batched path: a whole (X, Y) pair fits in one tile; amortize the
    # per-grid-step overhead across several pairs per step.
    if p >= 2 and n <= tn and m <= tm:
        per_pair = (n + m) * d * in_item + n * m * out_item
        pb = max(1, min(_cdiv(p, 2),                    # keep >= 2 grid points
                        _VMEM_BUDGET // max(1, 2 * per_pair)))
        return ("pairs", pb)

    # Tiled path: choose which operand is resident ("outer", cached norms)
    # and which is streamed ("inner", re-DMA'd once per outer tile).
    def candidate(x_is_outer):
        if x_is_outer:
            o_size, o_tile, o_align, i_size, i_tile = n, tn, align_n, m, tm
        else:
            o_size, o_tile, o_align, i_size, i_tile = m, tm, _LANE, n, tn
        o_tiles = _cdiv(o_size, o_tile)
        if p == 1 and o_tiles == 1 and o_size >= 2 * o_align:
            # Expose >= 2 parallel grid points so both v7x TensorCores work.
            o_tile = _ceil_to(_cdiv(o_size, 2), o_align)
            o_tiles = _cdiv(o_size, o_tile)
        i_tiles = _cdiv(i_size, i_tile)
        traffic = o_size * d + o_tiles * i_size * d       # input DMA per pair
        return (x_is_outer, o_tile, o_tiles, i_tile, i_tiles,
                p * o_tiles >= 2, traffic)

    best = sorted([candidate(True), candidate(False)],
                  key=lambda c: (not c[5], c[6]))[0]
    return ("tiled", best)


# ---------------------------------------------------------------------------
# pallas_call dispatchers
# ---------------------------------------------------------------------------

@functools.partial(jax.jit, static_argnames=("pb", "out_dtype"))
def _pairs_group(xs, ys, *, pb, out_dtype):
    p, n, d = xs.shape
    _, m, _ = ys.shape
    return pl.pallas_call(
        _cosine_pairs_kernel,
        out_shape=jax.ShapeDtypeStruct((p, n, m), out_dtype),
        grid=(_cdiv(p, pb),),
        in_specs=[pl.BlockSpec((pb, n, d), lambda g: (g, 0, 0)),
                  pl.BlockSpec((pb, m, d), lambda g: (g, 0, 0))],
        out_specs=pl.BlockSpec((pb, n, m), lambda g: (g, 0, 0)),
        compiler_params=pltpu.CompilerParams(
            dimension_semantics=("parallel",),
            vmem_limit_bytes=_VMEM_LIMIT),
    )(xs, ys)


@functools.partial(jax.jit,
                   static_argnames=("x_is_outer", "tn", "tm",
                                    "o_tiles", "i_tiles", "out_dtype"))
def _tiled_group(xs, ys, *, x_is_outer, tn, tm, o_tiles, i_tiles, out_dtype):
    p, n, d = xs.shape
    _, m, _ = ys.shape
    grid = (p, o_tiles, i_tiles)

    if x_is_outer:
        x_map = lambda pi, a, b: (pi, a, 0)
        y_map = lambda pi, a, b: (pi, b, 0)
        o_map = lambda pi, a, b: (pi, a, b)
        inv_scratch = pltpu.VMEM((tn, 1), jnp.float32)
    else:
        x_map = lambda pi, a, b: (pi, b, 0)
        y_map = lambda pi, a, b: (pi, a, 0)
        o_map = lambda pi, a, b: (pi, b, a)
        inv_scratch = pltpu.VMEM((1, tm), jnp.float32)

    kernel = functools.partial(_cosine_tiled_kernel, x_is_outer=x_is_outer)
    return pl.pallas_call(
        kernel,
        out_shape=jax.ShapeDtypeStruct((p, n, m), out_dtype),
        grid=grid,
        in_specs=[pl.BlockSpec((1, tn, d), x_map),
                  pl.BlockSpec((1, tm, d), y_map)],
        out_specs=pl.BlockSpec((1, tn, tm), o_map),
        scratch_shapes=[inv_scratch],
        compiler_params=pltpu.CompilerParams(
            # Pair and outer-tile axes are independent ("parallel", sharded
            # across v7x's 2 TensorCores); the inner axis carries the cached
            # outer-norm scratch, so it stays "arbitrary".
            dimension_semantics=("parallel", "parallel", "arbitrary"),
            vmem_limit_bytes=_VMEM_LIMIT),
    )(xs, ys)


# ---------------------------------------------------------------------------
# Module wrapper
# ---------------------------------------------------------------------------

class InnerProduct:
    """JAX/Pallas port of the PyTorch InnerProduct module.

    forward(Xs, Ys) == [normalize(X) @ normalize(Y).T for X, Y in zip(Xs, Ys)]
    (torch.nn.functional.normalize semantics, eps=1e-12).  Identically shaped
    pairs are batched into a single pallas_call.

    Note: normalization is folded around the raw MXU dot (inner operand
    pre-scaled, outer operand post-scaled); numerics match torch up to f32
    rounding, but extremely large-magnitude inputs could overflow f32 in the
    pre-scaled operand's partner where torch's normalize-first would not.
    """

    def __init__(self, output_dim):
        self.d = output_dim

    def __call__(self, Xs, Ys):
        assert len(Xs) == len(Ys)
        results = [None] * len(Xs)

        # Group identically shaped/typed pairs -> one kernel launch per group.
        groups = {}
        for idx, (X, Y) in enumerate(zip(Xs, Ys)):
            assert X.shape[1] == Y.shape[1] == self.d, (X.shape, Y.shape, self.d)
            key = (tuple(X.shape), tuple(Y.shape),
                   jnp.dtype(X.dtype).name, jnp.dtype(Y.dtype).name)
            groups.setdefault(key, []).append(idx)

        for (xshape, yshape, _, _), idxs in groups.items():
            n, d = xshape
            m, _ = yshape
            xs = jnp.stack([Xs[i] for i in idxs])            # (P, N, d)
            ys = jnp.stack([Ys[i] for i in idxs])            # (P, M, d)

            common = jnp.promote_types(xs.dtype, ys.dtype)
            if not jnp.issubdtype(common, jnp.floating):
                common = jnp.dtype(jnp.float32)
            xs = xs.astype(common)
            ys = ys.astype(common)
            out_dtype = common   # matches torch; halves HBM writes for bf16

            kind, info = _plan(len(idxs), n, m, d, common, out_dtype)
            if kind == "pairs":
                out = _pairs_group(xs, ys, pb=info, out_dtype=out_dtype)
            else:
                x_is_outer, o_tile, o_tiles, i_tile, i_tiles, _, _ = info
                tn, tm = (o_tile, i_tile) if x_is_outer else (i_tile, o_tile)
                out = _tiled_group(xs, ys, x_is_outer=x_is_outer, tn=tn, tm=tm,
                                   o_tiles=o_tiles, i_tiles=i_tiles,
                                   out_dtype=out_dtype)
            for k, i in enumerate(idxs):
                results[i] = out[k]
        return results

    # Mirror the nn.Module API.
    forward = __call__


if __name__ == "__main__":
    key = jax.random.PRNGKey(0)
    d = 32  # output_dim / feature dim (last axis)

    # Two identical small pairs (pair-batched path), one mid-size pair
    # (tiled path with forced outer split + ragged masked edge), and one pair
    # needing real N-tiling with a ragged last tile.
    shapes = [(16, 8), (16, 8), (40, 200), (600, 260)]
    keys = jax.random.split(key, 2 * len(shapes))
    Xs = [jax.random.normal(keys[2 * i], (n, d), dtype=jnp.float32)
          for i, (n, m) in enumerate(shapes)]
    Ys = [jax.random.normal(keys[2 * i + 1], (m, d), dtype=jnp.float32)
          for i, (n, m) in enumerate(shapes)]

    module = InnerProduct(output_dim=d)
    outs = module(Xs, Ys)
    outs = [jax.block_until_ready(o) for o in outs]

    # Sanity check against a plain-JAX reference (torch.normalize semantics).
    for (n, m), X, Y, O in zip(shapes, Xs, Ys, outs):
        xn = X / jnp.maximum(jnp.linalg.norm(X, axis=-1, keepdims=True), _EPS)
        yn = Y / jnp.maximum(jnp.linalg.norm(Y, axis=-1, keepdims=True), _EPS)
        ref = jnp.matmul(xn, yn.T, precision=jax.lax.Precision.HIGHEST)
        assert O.shape == (n, m), (O.shape, (n, m))
        err = float(jnp.max(jnp.abs(O - ref)))
        # Loose-ish tolerance: default f32 matmul passes on the MXU may differ
        # slightly from the HIGHEST-precision reference; structural errors
        # would be O(0.1-1) for these inputs.
        assert err < 1e-2, err

    print("KERNEL_OK")
</pallas_src>

<mosaic_0001>
module attributes {stable_mosaic.version = 11 : i64} {
  func.func @_cosine_pairs_kernel(%arg0: i32, %arg1: memref<1x16x32xf32, #tpu.memory_space<vmem>>, %arg2: memref<1x8x32xf32, #tpu.memory_space<vmem>>, %arg3: memref<1x16x8xf32, #tpu.memory_space<vmem>>) attributes {dimension_semantics = [#tpu.dimension_semantics<parallel>], iteration_bounds = array<i64: 2>, scalar_prefetch = 0 : i64, scratch_operands = 0 : i64, tpu.core_type = #tpu.core_type<tc>, window_params = [{transform_indices = @transform_0, window_bounds = array<i64: 1, 16, 32>}, {transform_indices = @transform_1, window_bounds = array<i64: 1, 8, 32>}, {transform_indices = @transform_2, window_bounds = array<i64: 1, 16, 8>}]} {
    %c0 = arith.constant 0 : index
    %c0_0 = arith.constant 0 : index
    %c0_1 = arith.constant 0 : index
    %0 = vector.load %arg1[%c0, %c0_0, %c0_1] : memref<1x16x32xf32, #tpu.memory_space<vmem>>, vector<1x16x32xf32>
    %c0_2 = arith.constant 0 : index
    %c0_3 = arith.constant 0 : index
    %c0_4 = arith.constant 0 : index
    %1 = vector.load %arg2[%c0_2, %c0_3, %c0_4] : memref<1x8x32xf32, #tpu.memory_space<vmem>>, vector<1x8x32xf32>
    %2 = arith.mulf %0, %0 : vector<1x16x32xf32>
    %cst = arith.constant dense<0.000000e+00> : vector<1x16xf32>
    %3 = vector.multi_reduction <add>, %2, %cst [2] : vector<1x16x32xf32> to vector<1x16xf32>
    %4 = vector.shape_cast %3 : vector<1x16xf32> to vector<1x16x1xf32>
    %cst_5 = arith.constant 1.000000e-24 : f32
    %5 = vector.broadcast %cst_5 : f32 to vector<1x16x1xf32>
    %6 = arith.maximumf %4, %5 : vector<1x16x1xf32>
    %7 = math.rsqrt %6 : vector<1x16x1xf32>
    %8 = arith.mulf %1, %1 : vector<1x8x32xf32>
    %cst_6 = arith.constant dense<0.000000e+00> : vector<1x8xf32>
    %9 = vector.multi_reduction <add>, %8, %cst_6 [2] : vector<1x8x32xf32> to vector<1x8xf32>
    %10 = vector.shape_cast %9 : vector<1x8xf32> to vector<1x8x1xf32>
    %cst_7 = arith.constant 1.000000e-24 : f32
    %11 = vector.broadcast %cst_7 : f32 to vector<1x8x1xf32>
    %12 = arith.maximumf %10, %11 : vector<1x8x1xf32>
    %13 = math.rsqrt %12 : vector<1x8x1xf32>
    %14 = vector.broadcast %13 : vector<1x8x1xf32> to vector<1x8x32xf32>
    %15 = arith.mulf %1, %14 : vector<1x8x32xf32>
    "tpu.trace_start"() <{level = 10 : i32, message = "pnd,pmd->pnm"}> : () -> ()
    %cst_8 = arith.constant dense<0.000000e+00> : vector<1x16x8xf32>
    %16 = tpu.matmul %0, %15, %cst_8 {dimension_numbers = #tpu.dot_dimension_numbers<[2], [2], [1], [1], [0, 0, 0, 1, 1, 1], [0], [0]>} : vector<1x16x32xf32>, vector<1x8x32xf32>, vector<1x16x8xf32> -> vector<1x16x8xf32>
    "tpu.trace_stop"() : () -> ()
    %17 = vector.broadcast %7 : vector<1x16x1xf32> to vector<1x16x8xf32>
    %18 = arith.mulf %16, %17 : vector<1x16x8xf32>
    %c0_9 = arith.constant 0 : index
    %c0_10 = arith.constant 0 : index
    %c0_11 = arith.constant 0 : index
    %19 = vector.load %arg3[%c0_9, %c0_10, %c0_11] : memref<1x16x8xf32, #tpu.memory_space<vmem>>, vector<1x16x8xf32>
    tpu.vector_store %arg3[%c0_9, %c0_10, %c0_11], %18 {strides = array<i32>} : memref<1x16x8xf32, #tpu.memory_space<vmem>>, vector<1x16x8xf32>,
    return
  }
  func.func @transform_0(%arg0: i32) -> (i32, i32, i32) {
    %c0_i32 = arith.constant 0 : i32
    %c0_i32_0 = arith.constant 0 : i32
    %c0_i32_1 = arith.constant 0 : i32
    return %arg0, %c0_i32, %c0_i32_0 : i32, i32, i32
  }
  func.func @transform_1(%arg0: i32) -> (i32, i32, i32) {
    %c0_i32 = arith.constant 0 : i32
    %c0_i32_0 = arith.constant 0 : i32
    %c0_i32_1 = arith.constant 0 : i32
    return %arg0, %c0_i32, %c0_i32_0 : i32, i32, i32
  }
  func.func @transform_2(%arg0: i32) -> (i32, i32, i32) {
    %c0_i32 = arith.constant 0 : i32
    %c0_i32_0 = arith.constant 0 : i32
    %c0_i32_1 = arith.constant 0 : i32
    return %arg0, %c0_i32, %c0_i32_0 : i32, i32, i32
  }
}

</mosaic_0001>

<llo_original>
// kernel: _pairs_group.1
$region0: #{_pairs_group.1}
  #allocation0 [shape = 'u32[]', space=smem, size = 0x4, offset = 0x4, fixed_abs, tag = 'smem constant byte address 0x4 - core index']
  #allocation1 [shape = 'u32[144,128]{1,0:T(1,128)}', space=vmem, size = 0x12000, scoped, tag = 'internal scratch']
  %s0 = inlined_call_operand.hbm [shape: f32[2,16,32], index: 0, kind: input, shape index: {}]
  %s1 = inlined_call_operand.hbm [shape: f32[2,8,32], index: 1, kind: input, shape index: {}]
  %s2 = inlined_call_operand.vmem [shape: f32[2,16,8], index: 2, kind: output, shape index: {}]
  %s3 = sld [smem:[#allocation0]]
  $region49: #{_pairs_group.1} parent=0
    _
  %s5 = ssub.s32 1, %s3
  %s6 = scalar_select 0, %s5, %s3
  $region1: #{_pairs_group.1} parent=0
    #allocation2 [shape = 'u8[16384]{0}', space=vmem, size = 0x4000, scoped, tag = 'input window, operand 0']
    #allocation3 [shape = 's32[2]{0}', space=sflag, size = 0x8, scoped, tag = 'scoped memory for _pairs_group.1']
    #allocation4 [shape = 'u8[8192]{0}', space=vmem, size = 0x2000, scoped, tag = 'input window, operand 1']
    #allocation5 [shape = 's32[2]{0}', space=sflag, size = 0x8, scoped, tag = 'scoped memory for _pairs_group.1']
    %7 = vsyncpa [#allocation3], 0
    %s8 = scalar_lea.sflag [#allocation3], 1
    %9 = vsyncpa %s8, 0
    %10 = vsyncpa [#allocation5], 0
    %s11 = scalar_lea.sflag [#allocation5], 1
    %12 = vsyncpa %s11, 0
    loop: start=0, step=1, limit=4
    $region2: #{_pairs_group.1} parent=1 // loop_pre_header
      _
    $region3: #{_pairs_group.1} parent=1 // loop_header
      %s14 = sphi 0, %s18
      %p15 = scmp.ge.s32.totalorder %s14, 4
      %s24 = sphi 0, %s26
      %s27 = sphi 0, %s24
      %s28 = sphi 0, %s27
      %s44 = sphi 0, %s28
      %s50 = sphi 0, %s52
      %s53 = sphi 0, %s50
      %s54 = sphi 0, %s53
      %s70 = sphi 0, %s54
      %s76 = sphi 0, %s78
      %s79 = sphi 0, %s76
      %s80 = sphi 0, %s79
      %s96 = sphi 0, %s80
    $region4: #{_pairs_group.1} parent=1 // loop_header_branch
      %17 = sbr.rel (%p15) target = $region8
    $region5: #{_pairs_group.1} parent=1 // loop_body
      %s19 = ssub.s32 %s14, 1
      %s20 = ssub.s32 %s14, 2
      %s21 = sadd.s32 %s14, 1
      %s22 = ssub.s32 %s14, %s21
      %p23 = scmp.eq.s32.totalorder %s22, 0
      %s25 = sadd.s32 %s24, 1
      %s26 = scalar_select %p23, %s24, %s25
      %p29 = pneg %p23
      %p30 = scmp.eq.s32.totalorder %s14, 1
      %p31 = por %p29, %p30
      %p32 = scmp.ne.s32.totalorder %s24, %s27
      %p33 = scmp.eq.s32.totalorder %s14, 0
      %p34 = por %p32, %p33
      %p35 = scmp.ne.s32.totalorder %s24, %s27
      %p36 = scmp.eq.s32.totalorder %s19, 1
      %p37 = por %p35, %p36
      %p38 = scmp.ne.s32.totalorder %s27, %s28
      %p39 = scmp.eq.s32.totalorder %s19, 0
      %p40 = por %p38, %p39
      %p41 = scmp.ne.s32.totalorder %s27, %s28
      %p42 = scmp.eq.s32.totalorder %s20, 1
      %p43 = por %p41, %p42
      %p45 = scmp.ne.s32.totalorder %s28, %s44
      %p46 = scmp.eq.s32.totalorder %s20, 0
      %p47 = por %p45, %p46
      %s48 = ssub.s32 %s14, %s21
      %p49 = scmp.eq.s32.totalorder %s48, 0
      %s51 = sadd.s32 %s50, 1
      %s52 = scalar_select %p49, %s50, %s51
      %p55 = pneg %p49
      %p56 = scmp.eq.s32.totalorder %s14, 1
      %p57 = por %p55, %p56
      %p58 = scmp.ne.s32.totalorder %s50, %s53
      %p59 = scmp.eq.s32.totalorder %s14, 0
      %p60 = por %p58, %p59
      %p61 = scmp.ne.s32.totalorder %s50, %s53
      %p62 = scmp.eq.s32.totalorder %s19, 1
      %p63 = por %p61, %p62
      %p64 = scmp.ne.s32.totalorder %s53, %s54
      %p65 = scmp.eq.s32.totalorder %s19, 0
      %p66 = por %p64, %p65
      %p67 = scmp.ne.s32.totalorder %s53, %s54
      %p68 = scmp.eq.s32.totalorder %s20, 1
      %p69 = por %p67, %p68
      %p71 = scmp.ne.s32.totalorder %s54, %s70
      %p72 = scmp.eq.s32.totalorder %s20, 0
      %p73 = por %p71, %p72
      %s74 = ssub.s32 %s14, %s21
      %p75 = scmp.eq.s32.totalorder %s74, 0
      %s77 = sadd.s32 %s76, 1
      %s78 = scalar_select %p75, %s76, %s77
      %p81 = pneg %p75
      %p82 = scmp.eq.s32.totalorder %s14, 1
      %p83 = por %p81, %p82
      %p84 = scmp.ne.s32.totalorder %s76, %s79
      %p85 = scmp.eq.s32.totalorder %s14, 0
      %p86 = por %p84, %p85
      %p87 = scmp.ne.s32.totalorder %s76, %s79
      %p88 = scmp.eq.s32.totalorder %s19, 1
      %p89 = por %p87, %p88
      %p90 = scmp.ne.s32.totalorder %s79, %s80
      %p91 = scmp.eq.s32.totalorder %s19, 0
      %p92 = por %p90, %p91
      %p93 = scmp.ne.s32.totalorder %s79, %s80
      %p94 = scmp.eq.s32.totalorder %s20, 1
      %p95 = por %p93, %p94
      %p97 = scmp.ne.s32.totalorder %s80, %s96
      %p98 = scmp.eq.s32.totalorder %s20, 0
      %p99 = por %p97, %p98
      %p100 = scmp.le.s32.totalorder 1, %s14
      %p101 = scmp.lt.s32.totalorder %s14, 3
      %p102 = pnand %p100, %p101
      %p103 = pneg %p102
      // Predicated region
      $region9: #{_pairs_group.1} parent=5 // pred_check
        _
      $region10: #{_pairs_group.1} parent=5 // pred_check_branch
        %105 = sbr.rel (%p102) target = $region12
      $region11: #{_pairs_group.1} parent=5 // pred_region
        %s106 = ssub.s32 %s14, 1
      $region12: #{_pairs_group.1} parent=5 // pred_fallthru
        _
      %p107 = scmp.lt.s32.totalorder %s14, 2
      // Predicated region
      $region13: #{_pairs_group.1} parent=5 // pred_check
        %p108 = pneg %p107
      $region14: #{_pairs_group.1} parent=5 // pred_check_branch
        %110 = sbr.rel (%p108) target = $region16
      $region15: #{_pairs_group.1} parent=5 // pred_region
        // Predicated region
        $region17: #{_pairs_group.1} parent=15 // pred_check
          %p111 = pneg %p34
        $region18: #{_pairs_group.1} parent=15 // pred_check_branch
          %113 = sbr.rel (%p111) target = $region20
        $region19: #{_pairs_group.1} parent=15 // pred_region
          %s114 = sand.u32 %s24, 1
          %s115 = scalar_lea.sflag [#allocation3], %s114
          %s116 = sand.u32 %s24, 1
          %s117 = smul.addr %s116, 16
          %s118 = scalar_lea.vmem [#allocation2], %s117
          %s120 = ssub.s32 256, 256
          %121 = vsyncadd %s115, %s120
          %s122 = smul.addr %s14, 2
          %s123 = smul.addr %s122, 128
          %s124 = scalar_lea.hbm %s0, %s123
          %s125 = sshll.u32 %s118, 4
          %s126 = int_to_ptr.vmem [resolvable:$true] %s125
          %131 = dma.hbm_to_vmem [thread:$0]  %s124, 256, %s126, %s115, 128, 128, 8
        $region20: #{_pairs_group.1} parent=15 // pred_fallthru
          _
        // Predicated region
        $region21: #{_pairs_group.1} parent=15 // pred_check
          %p132 = pneg %p60
        $region22: #{_pairs_group.1} parent=15 // pred_check_branch
          %134 = sbr.rel (%p132) target = $region24
        $region23: #{_pairs_group.1} parent=15 // pred_region
          %s135 = sand.u32 %s50, 1
          %s136 = scalar_lea.sflag [#allocation5], %s135
          %s137 = sand.u32 %s50, 1
          %s138 = smul.addr %s137, 8
          %s139 = scalar_lea.vmem [#allocation4], %s138
          %s141 = ssub.s32 128, 128
          %142 = vsyncadd %s136, %s141
          %s143 = smul.addr %s14, 128
          %s144 = scalar_lea.hbm %s1, %s143
          %s146 = sshll.u32 %s139, 4
          %s147 = int_to_ptr.vmem [resolvable:$true] %s146
          %149 = dma.hbm_to_vmem [thread:$0]  %s144, 128, %s147, %s136
        $region24: #{_pairs_group.1} parent=15 // pred_fallthru
          _
      $region16: #{_pairs_group.1} parent=5 // pred_fallthru
        _
      %p150 = scmp.le.s32.totalorder 1, %s14
      %p151 = scmp.lt.s32.totalorder %s14, 3
      %p152 = pnand %p150, %p151
      %p153 = pneg %p152
      // Predicated region
      $region25: #{_pairs_group.1} parent=5 // pred_check
        _
      $region26: #{_pairs_group.1} parent=5 // pred_check_branch
        %155 = sbr.rel (%p152) target = $region28
      $region27: #{_pairs_group.1} parent=5 // pred_region
        %s156 = ssub.s32 %s14, 1
        %s157 = sand.u32 %s27, 1
        %s158 = scalar_lea.sflag [#allocation3], %s157
        %s159 = sand.u32 %s27, 1
        %s160 = smul.addr %s159, 16
        %s161 = scalar_lea.vmem [#allocation2], %s160
        // Predicated region
        $region29: #{_pairs_group.1} parent=27 // pred_check
          %p162 = pneg %p40
        $region30: #{_pairs_group.1} parent=27 // pred_check_branch
          %164 = sbr.rel (%p162) target = $region32
        $region31: #{_pairs_group.1} parent=27 // pred_region
          %165 = dma.done %s158, 256
        $region32: #{_pairs_group.1} parent=27 // pred_fallthru
          _
        %s166 = sand.u32 %s53, 1
        %s167 = scalar_lea.sflag [#allocation5], %s166
        %s168 = sand.u32 %s53, 1
        %s169 = smul.addr %s168, 8
        %s170 = scalar_lea.vmem [#allocation4], %s169
        // Predicated region
        $region33: #{_pairs_group.1} parent=27 // pred_check
          %p171 = pneg %p66
        $region34: #{_pairs_group.1} parent=27 // pred_check_branch
          %173 = sbr.rel (%p171) target = $region36
        $region35: #{_pairs_group.1} parent=27 // pred_region
          %174 = dma.done %s167, 128
        $region36: #{_pairs_group.1} parent=27 // pred_fallthru
          _
        %s175 = sand.u32 %s27, 1
        %s176 = scalar_lea.sflag [#allocation3], %s175
        %s177 = sand.u32 %s27, 1
        %s178 = smul.addr %s177, 16
        %s179 = scalar_lea.vmem [#allocation2], %s178
        %p180 = pneg %p40
        %p181 = pneg %p37
        %s182 = sand.u32 %s53, 1
        %s183 = scalar_lea.sflag [#allocation5], %s182
        %s184 = sand.u32 %s53, 1
        %s185 = smul.addr %s184, 8
        %s186 = scalar_lea.vmem [#allocation4], %s185
        %p187 = pneg %p66
        %p188 = pneg %p63
        %p189 = pneg %p92
        %p190 = pneg %p89
        %p191 = scmp.lt.s32.totalorder %s19, 1
        %s192 = scalar_select %p191, %s19, 1
        %s193 = smul.addr %s192, 2
        %s194 = smul.addr %s193, 8
        %s195 = scalar_lea.vmem %s2, %s194
        %p196 = scmp.lt.s32.totalorder %s19, 1
        %s197 = scalar_select %p196, %s19, 1
        %s198 = smul.addr %s197, 2
        %s199 = smul.addr %s198, 8
        %s200 = scalar_lea.vmem %s2, %s199
        %v201 = vld [vmem:[%s161] sm:$0xff]
        %v202 = vld [vmem:[%s161 + $0x8] sm:$0xff]
        %v203 = vld [vmem:[%s170] sm:$0xff]
        %v204 = vmul.f32 %v201, %v201
        %v205 = vmul.f32 %v202, %v202
        %vm206 = vcmask 261120
        %v207 = vsel %vm206, %v204, 0.0
        %208 = vadd.xlane.f32.xlu0 %v207
        %v209 = vpop.xlane.xlu0 %208
        %v210 = vsel %vm206, %v205, 0.0
        %211 = vadd.xlane.f32.xlu0 %v210
        %v212 = vpop.xlane.xlu0 %211
        %v213 = vmax.f32 %v209, 1e-24
        %v214 = vmax.f32 %v212, 1e-24
        %v215 = vrsqrt.pop %v213
        %v216 = vrsqrt.pop %v214
        %v217 = vmul.f32 %v203, %v203
        %v218 = vsel %vm206, %v217, 0.0
        %219 = vadd.xlane.f32.xlu0 %v218
        %v220 = vpop.xlane.xlu0 %219
        %v221 = vmax.f32 %v220, 1e-24
        %v222 = vrsqrt.pop %v221
        %v223 = vmul.f32 %v203, %v222
        %v225 = vsel %vm206, %v201, 0
        %v228 = vsel %vm206, %v202, 0
        %v231 = vsel %vm206, %v223, 0
        %233 = vmatprep.subr.mxu0 0.0
        %234 = vmatpush1.xpose.msra.mxu0 %v231
        %235 = vmatprep.subr.mxu0 0.0
        %236 = vmatpush1.xpose.msra.mxu0 0.0
        %237 = vmatprep.subr.mxu0 0.0
        %238 = vmatpush1.xpose.msra.mxu0 0.0
        %239 = vmatprep.subr.mxu0 0.0
        %240 = vmatpush1.xpose.msra.mxu0 0.0
        %241 = vmatprep.subr.mxu0 0.0
        %242 = vmatpush1.xpose.msra.mxu0 0.0
        %243 = vmatprep.subr.mxu0 0.0
        %244 = vmatpush1.xpose.msra.mxu0 0.0
        %245 = vmatprep.subr.mxu0 0.0
        %246 = vmatpush1.xpose.msra.mxu0 0.0
        %247 = vmatprep.subr.mxu0 0.0
        %248 = vmatpush1.xpose.msra.mxu0 0.0
        %249 = vmatprep.subr.mxu0 0.0
        %250 = vmatpush1.xpose.msra.mxu0 0.0
        %251 = vmatprep.subr.mxu0 0.0
        %252 = vmatpush1.xpose.msra.mxu0 0.0
        %253 = vmatprep.subr.mxu0 0.0
        %254 = vmatpush1.xpose.msra.mxu0 0.0
        %255 = vmatprep.subr.mxu0 0.0
        %256 = vmatpush1.xpose.msra.mxu0 0.0
        %257 = vmatprep.subr.mxu0 0.0
        %258 = vmatpush1.xpose.msra.mxu0 0.0
        %259 = vmatprep.subr.mxu0 0.0
        %260 = vmatpush1.xpose.msra.mxu0 0.0
        %261 = vmatprep.subr.mxu0 0.0
        %262 = vmatpush1.xpose.msra.mxu0 0.0
        %263 = vmatprep.subr.mxu0 0.0
        %264 = vmatpush1.xpose.msra.mxu0 0.0
        %265 = vmatprep.subr.mxu0 0.0
        %266 = vmatpush1.xpose.msra.mxu0 0.0
        %267 = vmatprep.subr.mxu0 0.0
        %268 = vmatpush1.xpose.msra.mxu0 0.0
        %269 = vmatprep.subr.mxu0 0.0
        %270 = vmatpush1.xpose.msra.mxu0 0.0
        %271 = vmatprep.subr.mxu0 0.0
        %272 = vmatpush1.xpose.msra.mxu0 0.0
        %273 = vmatprep.subr.mxu0 0.0
        %274 = vmatpush1.xpose.msra.mxu0 0.0
        %275 = vmatprep.subr.mxu0 0.0
        %276 = vmatpush1.xpose.msra.mxu0 0.0
        %277 = vmatprep.subr.mxu0 0.0
        %278 = vmatpush1.xpose.msra.mxu0 0.0
        %279 = vmatprep.subr.mxu0 0.0
        %280 = vmatpush1.xpose.msra.mxu0 0.0
        %281 = vmatprep.subr.mxu0 0.0
        %282 = vmatpush1.xpose.msra.mxu0 0.0
        %283 = vmatprep.subr.mxu0 0.0
        %284 = vmatpush1.xpose.msra.mxu0 0.0
        %285 = vmatprep.subr.mxu0 0.0
        %286 = vmatpush1.xpose.msra.mxu0 0.0
        %287 = vmatprep.subr.mxu0 0.0
        %288 = vmatpush1.xpose.msra.mxu0 0.0
        %289 = vmatprep.subr.mxu0 0.0
        %290 = vmatpush1.xpose.msra.mxu0 0.0
        %291 = vmatprep.subr.mxu0 0.0
        %292 = vmatpush1.xpose.msra.mxu0 0.0
        %293 = vmatprep.subr.mxu0 0.0
        %294 = vmatpush1.xpose.msra.mxu0 0.0
        %295 = vmatprep.subr.mxu0 0.0
        %296 = vmatpush1.xpose.msra.mxu0 0.0
        %297 = vmatprep.mubr.f32.mxu0 0.0
        %298 = vmatmul.mubr.f32.gmra.mrb[0].mxu0 %v225
        %v299 = vpop.f32.mrb[0].mxu0
        %v300 = vadd.f32 0.0, %v299
        %v301 = vpop.f32.mrb[0].mxu0
        %302 = vmatprep.mubr.f32.mxu0 0.0
        %303 = vmatmul.mubr.f32.gmra.mrb[0].mxu0 %v228
        %v304 = vpop.f32.mrb[0].mxu0
        %v305 = vadd.f32 0.0, %v304
        %v306 = vpop.f32.mrb[0].mxu0
        %307 = vdwg.mxu0
        %v308 = vmul.f32 %v300, %v215
        %v309 = vmul.f32 %v305, %v216
        %vm310 = vcmask 64512
        %311 = vst.msk [vmem:[%s200] sm:$0xff] %vm310, %v308
        %312 = vst.msk [vmem:[%s200 + $0x8] sm:$0xff] %vm310, %v309
        %p313 = scmp.lt.s32.totalorder %s19, 1
        %s314 = scalar_select %p313, %s19, 1
        %s315 = smul.addr %s314, 2
        %s316 = smul.addr %s315, 8
        %s317 = scalar_lea.vmem %s2, %s316
        // Predicated region
        $region37: #{_pairs_group.1} parent=27 // pred_check
          %p318 = pneg %p89
        $region38: #{_pairs_group.1} parent=27 // pred_check_branch
          %320 = sbr.rel (%p318) target = $region40
        $region39: #{_pairs_group.1} parent=27 // pred_region
          _
        $region40: #{_pairs_group.1} parent=27 // pred_fallthru
          _
      $region28: #{_pairs_group.1} parent=5 // pred_fallthru
        _
      %p321 = scmp.le.s32.totalorder 2, %s14
      // Predicated region
      $region41: #{_pairs_group.1} parent=5 // pred_check
        %p322 = pneg %p321
      $region42: #{_pairs_group.1} parent=5 // pred_check_branch
        %324 = sbr.rel (%p322) target = $region44
      $region43: #{_pairs_group.1} parent=5 // pred_region
        %s325 = ssub.s32 %s14, 2
        // Predicated region
        $region45: #{_pairs_group.1} parent=43 // pred_check
          %p326 = pneg %p95
        $region46: #{_pairs_group.1} parent=43 // pred_check_branch
          %328 = sbr.rel (%p326) target = $region48
        $region47: #{_pairs_group.1} parent=43 // pred_region
          %p329 = scmp.lt.s32.totalorder %s20, 1
          %s330 = scalar_select %p329, %s20, 1
          %s331 = smul.addr %s330, 2
          %s332 = smul.addr %s331, 8
          %s333 = scalar_lea.vmem %s2, %s332
        $region48: #{_pairs_group.1} parent=43 // pred_fallthru
          _
      $region44: #{_pairs_group.1} parent=5 // pred_fallthru
        _
    $region6: #{_pairs_group.1} parent=1 // loop_footer
      %s18 = sadd.s32 1, %s14
    $region7: #{_pairs_group.1} parent=1 // loop_footer_branch
      %13 = sbr.rel target = $region3
    $region8: #{_pairs_group.1} parent=1 // loop_exit
      _
    %334 = vsyncpa [#allocation3], 1
    %s335 = scalar_lea.sflag [#allocation3], 1
    %336 = vsyncpa %s335, 1
    %337 = vsyncpa [#allocation5], 1
    %s338 = scalar_lea.sflag [#allocation5], 1
    %339 = vsyncpa %s338, 1

</llo_original>
